<compile_context>
chip_gen: v7x
topology: tpu7x:2x2x1
jax: 0.10.0
libtpu: 0.0.40
codegen_flags: <defaults>
</compile_context>

<pallas_src>
import math

import jax
import jax.numpy as jnp
from jax.experimental import pallas as pl
from jax.experimental.pallas import tpu as pltpu


_LANE = 1024       # lane-dense last axis, multiple of 128
_TILE_ROWS = 512   # rows per block, multiple of 8 -> 512*1024*4 B = 2 MiB (f32)
                   # in+out double-buffered = ~8 MiB VMEM: fits v5e/v6e/v7x defaults.


def _copy_kernel(x_ref, o_ref):
    # Identity copy of the current lane-dense tile.
    o_ref[...] = x_ref[...]


@jax.jit
def _pallas_copy_flat(flat):
    """Identity-copy a flat 1-D array via a tiled, lane-dense Pallas pipeline."""
    n = flat.shape[0]
    itemsize = jnp.dtype(flat.dtype).itemsize

    # Pad up to a multiple of the lane width so the slab is (rows, _LANE).
    pad = (-n) % _LANE
    if pad:
        flat = jnp.concatenate([flat, jnp.zeros((pad,), dtype=flat.dtype)])
    rows = (n + pad) // _LANE

    # Full-array block when small (legal even if rows % 8 != 0);
    # otherwise 512-row tiles (multiple of 8) with a pipelined grid.
    block_rows = rows if rows < _TILE_ROWS else _TILE_ROWS
    grid_rows = pl.cdiv(rows, block_rows)

    x2d = flat.reshape(rows, _LANE)
    y2d = pl.pallas_call(
        _copy_kernel,
        out_shape=jax.ShapeDtypeStruct((rows, _LANE), flat.dtype),
        grid_spec=pltpu.PrefetchScalarGridSpec(
            num_scalar_prefetch=0,
            grid=(grid_rows,),
            in_specs=[pl.BlockSpec((block_rows, _LANE), lambda i: (i, 0))],
            out_specs=pl.BlockSpec((block_rows, _LANE), lambda i: (i, 0)),
        ),
        compiler_params=pltpu.CompilerParams(
            dimension_semantics=("parallel",),
        ),
        cost_estimate=pl.CostEstimate(
            flops=0,
            transcendentals=0,
            bytes_accessed=2 * rows * _LANE * itemsize,
        ),
        input_output_aliases={0: 0},
    )(x2d)

    out = y2d.reshape(-1)
    if pad:
        out = out[:n]
    return out


def reshape_forward(inputs, output_shape, batch_first=True, use_pallas=True):
    """JAX/Pallas equivalent of torchfusion Reshape.forward."""
    if isinstance(output_shape, int):
        size = [output_shape]
    else:
        size = list(output_shape)

    in_shape = list(inputs.shape)
    if batch_first:
        input_total_size = int(math.prod(in_shape[1:]))
        final_shape = tuple([in_shape[0]] + size)
        checked_dims = in_shape[1:]
    else:
        input_total_size = int(math.prod(in_shape[:-1]))
        final_shape = tuple(size + [in_shape[-1]])
        checked_dims = in_shape[:-1]

    target_total_size = int(math.prod(size))
    if input_total_size != target_total_size:
        raise ValueError(
            " Reshape must preserve total dimension, input size: {} and output size: {}".format(
                checked_dims, output_shape
            )
        )

    if not use_pallas:
        # Contiguous reshape is metadata-only in XLA: zero HBM traffic.
        return inputs.reshape(final_shape)

    # Flatten everything (batch included) onto a lane-dense slab, copy once
    # through the tiled Pallas pipeline, re-apply the logical shape as metadata.
    flat = inputs.reshape(-1)
    out_flat = _pallas_copy_flat(flat)
    return out_flat.reshape(final_shape)


if __name__ == "__main__":
    key = jax.random.PRNGKey(0)

    # batch_first=True case: NCHW input (2, 4, 16, 16) -> (2, 8, 128)
    x = jax.random.normal(key, (2, 4, 16, 16), dtype=jnp.float32)
    y = reshape_forward(x, (8, 128), batch_first=True)
    y = jax.block_until_ready(y)
    assert y.shape == (2, 8, 128), y.shape
    assert jnp.array_equal(y, x.reshape(2, 8, 128)), "value mismatch (batch_first=True)"

    # batch_first=False case: input (4, 16, 16, 2) -> (8, 128, 2)
    x2 = jax.random.normal(jax.random.PRNGKey(0), (4, 16, 16, 2), dtype=jnp.float32)
    y2 = reshape_forward(x2, (8, 128), batch_first=False)
    y2 = jax.block_until_ready(y2)
    assert y2.shape == (8, 128, 2), y2.shape
    assert jnp.array_equal(y2, x2.reshape(8, 128, 2)), "value mismatch (batch_first=False)"

    # int output_shape + non-lane-aligned total (exercises the padded path).
    x3 = jax.random.normal(jax.random.PRNGKey(1), (2, 3, 5, 7), dtype=jnp.float32)
    y3 = reshape_forward(x3, 105, batch_first=True)
    y3 = jax.block_until_ready(y3)
    assert y3.shape == (2, 105), y3.shape
    assert jnp.array_equal(y3, x3.reshape(2, 105)), "value mismatch (int output_shape)"

    # Metadata-only fast path (recommended in production: no copy at all).
    y_fast = jax.block_until_ready(reshape_forward(x, (8, 128), use_pallas=False))
    assert jnp.array_equal(y_fast, y), "fast path mismatch"

    print("KERNEL_OK")
</pallas_src>

<mosaic_0001>
module attributes {stable_mosaic.version = 11 : i64} {
  func.func @_copy_kernel(%arg0: i32, %arg1: memref<2x1024xf32, #tpu.memory_space<vmem>>, %arg2: memref<2x1024xf32, #tpu.memory_space<vmem>>) attributes {dimension_semantics = [#tpu.dimension_semantics<parallel>], iteration_bounds = array<i64: 1>, scalar_prefetch = 0 : i64, scratch_operands = 0 : i64, tpu.core_type = #tpu.core_type<tc>, window_params = [{transform_indices = @transform_0, window_bounds = array<i64: 2, 1024>}, {transform_indices = @transform_1, window_bounds = array<i64: 2, 1024>}]} {
    %c0 = arith.constant 0 : index
    %c0_0 = arith.constant 0 : index
    %0 = vector.load %arg1[%c0, %c0_0] : memref<2x1024xf32, #tpu.memory_space<vmem>>, vector<2x1024xf32>
    %c0_1 = arith.constant 0 : index
    %c0_2 = arith.constant 0 : index
    %1 = vector.load %arg2[%c0_1, %c0_2] : memref<2x1024xf32, #tpu.memory_space<vmem>>, vector<2x1024xf32>
    tpu.vector_store %arg2[%c0_1, %c0_2], %0 {strides = array<i32>} : memref<2x1024xf32, #tpu.memory_space<vmem>>, vector<2x1024xf32>,
    return
  }
  func.func @transform_0(%arg0: i32) -> (i32, i32) {
    %c0_i32 = arith.constant 0 : i32
    %c0_i32_0 = arith.constant 0 : i32
    return %arg0, %c0_i32 : i32, i32
  }
  func.func @transform_1(%arg0: i32) -> (i32, i32) {
    %c0_i32 = arith.constant 0 : i32
    %c0_i32_0 = arith.constant 0 : i32
    return %arg0, %c0_i32 : i32, i32
  }
}

</mosaic_0001>

<llo_original>
// kernel: _pallas_copy_flat.1
$region0: #{_pallas_copy_flat.1}
  #allocation0 [shape = 'u32[]', space=smem, size = 0x4, offset = 0x4, fixed_abs, tag = 'smem constant byte address 0x4 - core index']
  #allocation1 [shape = 'u32[144,128]{1,0:T(1,128)}', space=vmem, size = 0x12000, scoped, tag = 'internal scratch']
  %s0 = inlined_call_operand.vmem [shape: f32[2,1024], index: 0, kind: input, shape index: {}, may-alias: {0,1}]
  %s1 = inlined_call_operand.vmem [shape: f32[2,1024], index: 1, kind: output, shape index: {}, may-alias: {0,1}]
  %s2 = sld [smem:[#allocation0]]
  $region14: #{_pallas_copy_flat.1} parent=0
    _
  %s4 = ssub.s32 1, %s2
  %s5 = scalar_select 0, %s4, %s2
  // Predicated region
  $region2: #{_pallas_copy_flat.1} parent=0 // pred_check
    _
  $region3: #{_pallas_copy_flat.1} parent=0 // pred_check_branch
    %7 = sbr.rel (0) target = $region5
  $region4: #{_pallas_copy_flat.1} parent=0 // pred_region
    _
  $region5: #{_pallas_copy_flat.1} parent=0 // pred_fallthru
    _
  %v8 = vld [vmem:[%s0] sm:$0xff]
  %v9 = vld [vmem:[%s0 + $0x8] sm:$0xff]
  %10 = vst [vmem:[%s1] sm:$0xff] %v8
  %11 = vst [vmem:[%s1 + $0x8] sm:$0xff] %v9
  // Predicated region
  $region6: #{_pallas_copy_flat.1} parent=0 // pred_check
    _
  $region7: #{_pallas_copy_flat.1} parent=0 // pred_check_branch
    %13 = sbr.rel (0) target = $region9
  $region8: #{_pallas_copy_flat.1} parent=0 // pred_region
    _
  $region9: #{_pallas_copy_flat.1} parent=0 // pred_fallthru
    _
  // Predicated region
  $region10: #{_pallas_copy_flat.1} parent=0 // pred_check
    _
  $region11: #{_pallas_copy_flat.1} parent=0 // pred_check_branch
    %15 = sbr.rel (0) target = $region13
  $region12: #{_pallas_copy_flat.1} parent=0 // pred_region
    _
  $region13: #{_pallas_copy_flat.1} parent=0 // pred_fallthru
    _

</llo_original>
